<compile_context>
chip_gen: v7x
topology: tpu7x:2x2x1
jax: 0.10.0
libtpu: 0.0.40
codegen_flags: <defaults>
</compile_context>

<pallas_src>
import jax
import jax.numpy as jnp
from jax.experimental import pallas as pl
from jax.experimental.pallas import tpu as pltpu


def _mlp_kernel(x_ref, w1_ref, b1_ref, w2_ref, b2_ref, o_ref):
    # Layer 1 on the MXU: (TB, 13) bf16 @ (13, 9) bf16 -> f32 accumulation.
    h = jnp.dot(x_ref[...], w1_ref[...], preferred_element_type=jnp.float32)
    # Bias + ReLU in f32 on the VPU.
    h = jnp.maximum(h + b1_ref[...], 0.0)
    # Layer 2 (out_features = 1): VPU multiply + lane reduce instead of an
    # N=1, K=9 MXU pass. b2 is a scalar read from SMEM.
    out = jnp.sum(h * w2_ref[...], axis=-1, keepdims=True) + b2_ref[0]
    o_ref[...] = out.astype(o_ref.dtype)


def _round_up(a, m):
    return (a + m - 1) // m * m


def binary_classification_forward(x, w1, b1, w2, b2, *, tb_max=2048):
    """x: (B, 13) float32.
    w1: (13, 9), b1: (1, 9), w2: (9, 1), b2: (1, 1)  (transposed vs PyTorch).
    Returns logits (B, 1) float32."""
    B, F_in = x.shape
    H = w1.shape[1]

    # Batch tile: multiple of 8 sublanes; bounded so VMEM stays small even on v7x.
    TB = min(tb_max, _round_up(B, 8))
    B_pad = _round_up(B, TB)
    if B_pad != B:
        x = jnp.pad(x, ((0, B_pad - B), (0, 0)))

    # MXU operands in bf16; everything else stays f32.
    x_bf = x.astype(jnp.bfloat16)
    w1_bf = w1.astype(jnp.bfloat16)
    b1_row = b1.reshape(1, H).astype(jnp.float32)
    w2_row = w2.reshape(1, H).astype(jnp.float32)   # (9,1) -> (1,9) row for VPU reduce
    b2_s = b2.reshape(1).astype(jnp.float32)        # scalar in SMEM

    grid = (B_pad // TB,)

    out = pl.pallas_call(
        _mlp_kernel,
        out_shape=jax.ShapeDtypeStruct((B_pad, 1), jnp.float32),
        grid=grid,
        in_specs=[
            pl.BlockSpec((TB, F_in), lambda i: (i, 0)),          # x: batch-tiled
            pl.BlockSpec((F_in, H), lambda i: (0, 0)),           # W1: resident
            pl.BlockSpec((1, H), lambda i: (0, 0)),              # b1: resident
            pl.BlockSpec((1, H), lambda i: (0, 0)),              # W2 row: resident
            pl.BlockSpec(memory_space=pltpu.MemorySpace.SMEM),   # b2: SMEM scalar
        ],
        out_specs=pl.BlockSpec((TB, 1), lambda i: (i, 0)),
        compiler_params=pltpu.CompilerParams(
            dimension_semantics=("parallel",),
            vmem_limit_bytes=32 * 1024 * 1024,
        ),
        cost_estimate=pl.CostEstimate(
            flops=2 * B_pad * F_in * H + 2 * B_pad * H,
            transcendentals=0,
            bytes_accessed=2 * B_pad * F_in      # bf16 x read
            + 2 * F_in * H + 4 * H + 4 * H + 4   # weights/biases
            + 4 * B_pad,                         # f32 logits write
        ),
    )(x_bf, w1_bf, b1_row, w2_row, b2_s)

    return out[:B]


def init_params(key):
    """Deterministic init mimicking torch.nn.Linear defaults
    (uniform(-1/sqrt(fan_in), 1/sqrt(fan_in)))."""
    k1, k2, k3, k4 = jax.random.split(key, 4)
    in1, out1 = 13, 9
    in2, out2 = 9, 1
    bound1 = 1.0 / jnp.sqrt(jnp.float32(in1))
    bound2 = 1.0 / jnp.sqrt(jnp.float32(in2))
    # Stored as (in_features, out_features) so the kernel computes x @ W + b.
    w1 = jax.random.uniform(k1, (in1, out1), jnp.float32, -bound1, bound1)
    b1 = jax.random.uniform(k2, (1, out1), jnp.float32, -bound1, bound1)
    w2 = jax.random.uniform(k3, (in2, out2), jnp.float32, -bound2, bound2)
    b2 = jax.random.uniform(k4, (1, out2), jnp.float32, -bound2, bound2)
    return w1, b1, w2, b2


if __name__ == "__main__":
    key = jax.random.PRNGKey(0)
    kx, kp = jax.random.split(key)

    batch = 8
    x = jax.random.normal(kx, (batch, 13), jnp.float32)
    w1, b1, w2, b2 = init_params(kp)

    out = binary_classification_forward(x, w1, b1, w2, b2)
    out = jax.block_until_ready(out)

    # Pure-JAX f32 reference (same math as the PyTorch forward). Tolerance is
    # loosened because the kernel uses bf16 MXU operands with f32 accumulation.
    ref_f32 = jnp.maximum(x @ w1 + b1, 0.0) @ w2 + b2
    # bf16-matched reference for a tighter check.
    h_bf = jnp.dot(x.astype(jnp.bfloat16), w1.astype(jnp.bfloat16),
                   preferred_element_type=jnp.float32)
    ref_bf = jnp.maximum(h_bf + b1, 0.0) @ w2 + b2

    assert out.shape == (batch, 1)
    assert jnp.allclose(out, ref_bf, atol=1e-3, rtol=1e-3)
    assert jnp.allclose(out, ref_f32, atol=3e-2, rtol=3e-2)

    print("KERNEL_OK")
</pallas_src>

<mosaic_0001>
module attributes {stable_mosaic.version = 11 : i64} {
  func.func @_mlp_kernel(%arg0: i32, %arg1: memref<8x13xbf16, #tpu.memory_space<vmem>>, %arg2: memref<13x9xbf16, #tpu.memory_space<vmem>>, %arg3: memref<1x9xf32, #tpu.memory_space<vmem>>, %arg4: memref<1x9xf32, #tpu.memory_space<vmem>>, %arg5: memref<1xf32, #tpu.memory_space<smem>>, %arg6: memref<8x1xf32, #tpu.memory_space<vmem>>) attributes {dimension_semantics = [#tpu.dimension_semantics<parallel>], iteration_bounds = array<i64: 1>, scalar_prefetch = 0 : i64, scratch_operands = 0 : i64, tpu.core_type = #tpu.core_type<tc>, window_params = [{transform_indices = @transform_0, window_bounds = array<i64: 8, 13>}, {pipeline_mode = #tpu.pipeline_mode<synchronous>, transform_indices = @transform_1, window_bounds = array<i64: 13, 9>}, {pipeline_mode = #tpu.pipeline_mode<synchronous>, transform_indices = @transform_2, window_bounds = array<i64: 1, 9>}, {pipeline_mode = #tpu.pipeline_mode<synchronous>, transform_indices = @transform_3, window_bounds = array<i64: 1, 9>}, {transform_indices = @transform_4, window_bounds = array<i64: 1>}, {transform_indices = @transform_5, window_bounds = array<i64: 8, 1>}]} {
    %c0 = arith.constant 0 : index
    %c0_0 = arith.constant 0 : index
    %0 = vector.load %arg1[%c0, %c0_0] : memref<8x13xbf16, #tpu.memory_space<vmem>>, vector<8x13xbf16>
    %c0_1 = arith.constant 0 : index
    %c0_2 = arith.constant 0 : index
    %1 = vector.load %arg2[%c0_1, %c0_2] : memref<13x9xbf16, #tpu.memory_space<vmem>>, vector<13x9xbf16>
    %cst = arith.constant dense<0.000000e+00> : vector<8x9xf32>
    %2 = tpu.matmul %0, %1, %cst {dimension_numbers = #tpu.dot_dimension_numbers<[1], [0], [0], [1], [0, 0, 1, 1], [], []>} : vector<8x13xbf16>, vector<13x9xbf16>, vector<8x9xf32> -> vector<8x9xf32>
    %c0_3 = arith.constant 0 : index
    %c0_4 = arith.constant 0 : index
    %3 = vector.load %arg3[%c0_3, %c0_4] : memref<1x9xf32, #tpu.memory_space<vmem>>, vector<1x9xf32>
    %4 = vector.broadcast %3 : vector<1x9xf32> to vector<8x9xf32>
    %5 = arith.addf %2, %4 : vector<8x9xf32>
    %cst_5 = arith.constant 0.000000e+00 : f32
    %6 = vector.broadcast %cst_5 : f32 to vector<8x9xf32>
    %7 = arith.maximumf %5, %6 : vector<8x9xf32>
    %c0_6 = arith.constant 0 : index
    %c0_7 = arith.constant 0 : index
    %8 = vector.load %arg4[%c0_6, %c0_7] : memref<1x9xf32, #tpu.memory_space<vmem>>, vector<1x9xf32>
    %9 = vector.broadcast %8 : vector<1x9xf32> to vector<8x9xf32>
    %10 = arith.mulf %7, %9 : vector<8x9xf32>
    %cst_8 = arith.constant dense<0.000000e+00> : vector<8xf32>
    %11 = vector.multi_reduction <add>, %10, %cst_8 [1] : vector<8x9xf32> to vector<8xf32>
    %12 = vector.shape_cast %11 : vector<8xf32> to vector<8x1xf32>
    %c0_9 = arith.constant 0 : index
    %13 = memref.load %arg5[%c0_9] : memref<1xf32, #tpu.memory_space<smem>>
    %14 = vector.broadcast %13 : f32 to vector<8x1xf32>
    %15 = arith.addf %12, %14 : vector<8x1xf32>
    %c0_10 = arith.constant 0 : index
    %c0_11 = arith.constant 0 : index
    %16 = vector.load %arg6[%c0_10, %c0_11] : memref<8x1xf32, #tpu.memory_space<vmem>>, vector<8x1xf32>
    tpu.vector_store %arg6[%c0_10, %c0_11], %15 {strides = array<i32>} : memref<8x1xf32, #tpu.memory_space<vmem>>, vector<8x1xf32>,
    return
  }
  func.func @transform_0(%arg0: i32) -> (i32, i32) {
    %c0_i32 = arith.constant 0 : i32
    %c0_i32_0 = arith.constant 0 : i32
    return %arg0, %c0_i32 : i32, i32
  }
  func.func @transform_1(%arg0: i32) -> (i32, i32) {
    %c0_i32 = arith.constant 0 : i32
    %c0_i32_0 = arith.constant 0 : i32
    %c0_i32_1 = arith.constant 0 : i32
    return %c0_i32, %c0_i32_0 : i32, i32
  }
  func.func @transform_2(%arg0: i32) -> (i32, i32) {
    %c0_i32 = arith.constant 0 : i32
    %c0_i32_0 = arith.constant 0 : i32
    %c0_i32_1 = arith.constant 0 : i32
    return %c0_i32, %c0_i32_0 : i32, i32
  }
  func.func @transform_3(%arg0: i32) -> (i32, i32) {
    %c0_i32 = arith.constant 0 : i32
    %c0_i32_0 = arith.constant 0 : i32
    %c0_i32_1 = arith.constant 0 : i32
    return %c0_i32, %c0_i32_0 : i32, i32
  }
  func.func @transform_4(%arg0: i32) -> i32 {
    %c0_i32 = arith.constant 0 : i32
    %c0_i32_0 = arith.constant 0 : i32
    return %c0_i32 : i32
  }
  func.func @transform_5(%arg0: i32) -> (i32, i32) {
    %c0_i32 = arith.constant 0 : i32
    %c0_i32_0 = arith.constant 0 : i32
    return %arg0, %c0_i32 : i32, i32
  }
}

</mosaic_0001>

<llo_original>
// kernel: tpu_custom_call.1
$region0: #{tpu_custom_call.1}
  #allocation0 [shape = 'u32[]', space=smem, size = 0x4, offset = 0x4, fixed_abs, tag = 'smem constant byte address 0x4 - core index']
  #allocation1 [shape = 'u32[144,128]{1,0:T(1,128)}', space=vmem, size = 0x12000, scoped, tag = 'internal scratch']
  #allocation2 [shape = 'f32[1]{0:T(128)S(6)}', space=smem, size = 0x200, scoped, tag = 'scoped memory for tpu_custom_call.1']
  %s0 = inlined_call_operand.hbm [shape: bf16[8,13], index: 0, kind: input, shape index: {}]
  %s1 = inlined_call_operand.hbm [shape: bf16[13,9], index: 1, kind: input, shape index: {}]
  %s2 = inlined_call_operand.vmem [shape: f32[1,9], index: 2, kind: input, shape index: {}]
  %s3 = inlined_call_operand.vmem [shape: f32[1,9], index: 3, kind: input, shape index: {}]
  %s4 = inlined_call_operand.<no memory space> [shape: f32[1], index: 4, kind: input, shape index: {}]
  %s5 = inlined_call_operand.vmem [shape: f32[8,1], index: 5, kind: output, shape index: {}]
  %s6 = sld [smem:[#allocation0]]
  $region38: #{tpu_custom_call.1} parent=0
    _
  %s8 = ssub.s32 1, %s6
  %s9 = scalar_select 0, %s8, %s6
  %10 = sst [smem:[#allocation2]] %s4
  $region1: #{tpu_custom_call.1} parent=0
    #allocation3 [shape = 'u8[2048]{0}', space=vmem, size = 0x800, scoped, tag = 'input window, operand 0, single buffered']
    #allocation4 [shape = 's32[1]{0}', space=sflag, size = 0x4, scoped, tag = 'scoped memory for tpu_custom_call.1']
    #allocation5 [shape = 'u8[4096]{0}', space=vmem, size = 0x1000, scoped, tag = 'input window, operand 1, single buffered']
    #allocation6 [shape = 's32[1]{0}', space=sflag, size = 0x4, scoped, tag = 'scoped memory for tpu_custom_call.1']
    %11 = vsyncpa [#allocation4], 0
    %12 = vsyncpa [#allocation6], 0
    // Predicated region
    $region2: #{tpu_custom_call.1} parent=1 // pred_check
      _
    $region3: #{tpu_custom_call.1} parent=1 // pred_check_branch
      %14 = sbr.rel (0) target = $region5
    $region4: #{tpu_custom_call.1} parent=1 // pred_region
      %s16 = ssub.s32 64, 64
      %17 = vsyncadd [#allocation4], %s16
      %s19 = sshll.u32 [#allocation3], 4
      %s20 = int_to_ptr.vmem [resolvable:$true] %s19
      %22 = dma.hbm_to_vmem [thread:$0]  %s0, 64, %s20, [#allocation4]
    $region5: #{tpu_custom_call.1} parent=1 // pred_fallthru
      _
    // Predicated region
    $region6: #{tpu_custom_call.1} parent=1 // pred_check
      _
    $region7: #{tpu_custom_call.1} parent=1 // pred_check_branch
      %24 = sbr.rel (0) target = $region9
    $region8: #{tpu_custom_call.1} parent=1 // pred_region
      %s26 = ssub.s32 128, 128
      %27 = vsyncadd [#allocation6], %s26
      %s28 = sshll.u32 [#allocation5], 4
      %s29 = int_to_ptr.vmem [resolvable:$true] %s28
      %34 = dma.hbm_to_vmem [thread:$0]  %s1, 128, %s29, [#allocation6], 64, 64, 4
    $region9: #{tpu_custom_call.1} parent=1 // pred_fallthru
      _
    // Predicated region
    $region10: #{tpu_custom_call.1} parent=1 // pred_check
      _
    $region11: #{tpu_custom_call.1} parent=1 // pred_check_branch
      %36 = sbr.rel (0) target = $region13
    $region12: #{tpu_custom_call.1} parent=1 // pred_region
      _
    $region13: #{tpu_custom_call.1} parent=1 // pred_fallthru
      _
    // Predicated region
    $region14: #{tpu_custom_call.1} parent=1 // pred_check
      _
    $region15: #{tpu_custom_call.1} parent=1 // pred_check_branch
      %38 = sbr.rel (0) target = $region17
    $region16: #{tpu_custom_call.1} parent=1 // pred_region
      _
    $region17: #{tpu_custom_call.1} parent=1 // pred_fallthru
      _
    // Predicated region
    $region18: #{tpu_custom_call.1} parent=1 // pred_check
      _
    $region19: #{tpu_custom_call.1} parent=1 // pred_check_branch
      %40 = sbr.rel (0) target = $region21
    $region20: #{tpu_custom_call.1} parent=1 // pred_region
      _
    $region21: #{tpu_custom_call.1} parent=1 // pred_fallthru
      _
    // Predicated region
    $region22: #{tpu_custom_call.1} parent=1 // pred_check
      _
    $region23: #{tpu_custom_call.1} parent=1 // pred_check_branch
      %42 = sbr.rel (0) target = $region25
    $region24: #{tpu_custom_call.1} parent=1 // pred_region
      %43 = dma.done [#allocation4], 64
    $region25: #{tpu_custom_call.1} parent=1 // pred_fallthru
      _
    // Predicated region
    $region26: #{tpu_custom_call.1} parent=1 // pred_check
      _
    $region27: #{tpu_custom_call.1} parent=1 // pred_check_branch
      %45 = sbr.rel (0) target = $region29
    $region28: #{tpu_custom_call.1} parent=1 // pred_region
      %46 = dma.done [#allocation6], 128
    $region29: #{tpu_custom_call.1} parent=1 // pred_fallthru
      _
    %v48 = vld [vmem:[#allocation3] sm:$0xf]
    %v49 = vld [vmem:[#allocation5] sm:$0xf]
    %v50 = vld [vmem:[#allocation5 + $0x4] sm:$0x7]
    %v51 = vld [vmem:[%s2] sm:$0x1]
    %v53 = vlaneseq
    %v54 = vshrl.u32 %v53, 7
    %v55 = vsub.s32 0, %v54
    %v56 = vrot.slane %v51, %v55
    %v60 = vunpack.c.l.b16 %v49
    %v61 = vunpack.c.l.b16 %v50
    %v62 = vpack.c.b16 %v61, %v60
    %vm63 = vcmask 105472
    %v65 = vsel %vm63, %v48, 0
    %vm67 = vcmask 1045504
    %vm68 = vcmask 1046528
    %v69 = vsel %vm67, 4294967295, 65535
    %v70 = vsel %vm68, %v69, 0
    %v72 = vand.u32 %v62, %v70
    %74 = vmatprep.subr.bf16.mxu0 0
    %75 = vmatpush1.bf16.msra.mxu0 %v72
    %76 = vmatprep.subr.bf16.mxu0 0
    %77 = vmatpush1.bf16.msra.mxu0 0
    %78 = vmatprep.subr.bf16.mxu0 0
    %79 = vmatpush1.bf16.msra.mxu0 0
    %80 = vmatprep.subr.bf16.mxu0 0
    %81 = vmatpush1.bf16.msra.mxu0 0
    %82 = vmatprep.subr.bf16.mxu0 0
    %83 = vmatpush1.bf16.msra.mxu0 0
    %84 = vmatprep.subr.bf16.mxu0 0
    %85 = vmatpush1.bf16.msra.mxu0 0
    %86 = vmatprep.subr.bf16.mxu0 0
    %87 = vmatpush1.bf16.msra.mxu0 0
    %88 = vmatprep.subr.bf16.mxu0 0
    %89 = vmatpush1.bf16.msra.mxu0 0
    %90 = vmatprep.subr.bf16.mxu0 0
    %91 = vmatpush1.bf16.msra.mxu0 0
    %92 = vmatprep.subr.bf16.mxu0 0
    %93 = vmatpush1.bf16.msra.mxu0 0
    %94 = vmatprep.subr.bf16.mxu0 0
    %95 = vmatpush1.bf16.msra.mxu0 0
    %96 = vmatprep.subr.bf16.mxu0 0
    %97 = vmatpush1.bf16.msra.mxu0 0
    %98 = vmatprep.subr.bf16.mxu0 0
    %99 = vmatpush1.bf16.msra.mxu0 0
    %100 = vmatprep.subr.bf16.mxu0 0
    %101 = vmatpush1.bf16.msra.mxu0 0
    %102 = vmatprep.subr.bf16.mxu0 0
    %103 = vmatpush1.bf16.msra.mxu0 0
    %104 = vmatprep.subr.bf16.mxu0 0
    %105 = vmatpush1.bf16.msra.mxu0 0
    %106 = vmatprep.mubr.bf16.mxu0 0
    %107 = vmatmul.mubr.bf16.gmra.mrb[0].mxu0 %v65
    %v108 = vpop.f32.mrb[0].mxu0
    %v109 = vadd.f32 %v56, %v108
    %v110 = vpop.f32.mrb[0].mxu0
    %v111 = vpop.f32.mrb[0].mxu0
    %v112 = vpop.f32.mrb[0].mxu0
    %113 = vdwg.mxu0
    %v114 = vmax.f32 %v109, 0.0
    %v115 = vld [vmem:[%s3] sm:$0x1]
    %v117 = vlaneseq
    %v118 = vshrl.u32 %v117, 7
    %v119 = vsub.s32 0, %v118
    %v120 = vrot.slane %v115, %v119
    %v122 = vmul.f32 %v114, %v120
    %vm123 = vcmask 72704
    %v124 = vsel %vm123, %v122, 0.0
    %125 = vadd.xlane.f32.xlu0 %v124
    %v126 = vpop.xlane.xlu0 %125
    %s127 = sld [smem:[#allocation2]]
    %v128 = vstv %s127
    %v129 = vadd.f32 %v126, %v128
    %vm130 = vcmask 7168
    %131 = vst.msk [vmem:[%s5] sm:$0xff] %vm130, %v129
    // Predicated region
    $region30: #{tpu_custom_call.1} parent=1 // pred_check
      _
    $region31: #{tpu_custom_call.1} parent=1 // pred_check_branch
      %133 = sbr.rel (0) target = $region33
    $region32: #{tpu_custom_call.1} parent=1 // pred_region
      _
    $region33: #{tpu_custom_call.1} parent=1 // pred_fallthru
      _
    // Predicated region
    $region34: #{tpu_custom_call.1} parent=1 // pred_check
      _
    $region35: #{tpu_custom_call.1} parent=1 // pred_check_branch
      %135 = sbr.rel (0) target = $region37
    $region36: #{tpu_custom_call.1} parent=1 // pred_region
      _
    $region37: #{tpu_custom_call.1} parent=1 // pred_fallthru
      _
    %136 = vsyncpa [#allocation4], 1
    %137 = vsyncpa [#allocation6], 1

</llo_original>
